<compile_context>
chip_gen: v5e
topology: v5e:2x2
jax: 0.10.0
libtpu: 0.0.40
codegen_flags: <defaults>
</compile_context>

<pallas_src>
import functools

import jax
import jax.numpy as jnp
from jax import lax
from jax.experimental import pallas as pl
from jax.experimental.pallas import tpu as pltpu


def _round_up(x, m):
    return ((x + m - 1) // m) * m


# -----------------------------------------------------------------------------
# Kernel: fused tiled matmul (torch weight layout) + bias
# -----------------------------------------------------------------------------
def linear_kernel(x_ref, w_ref, b_ref, o_ref, acc_ref):
    # x_ref: (tm, tk)   w_ref: (tn, tk) [torch (out,in) layout]
    # b_ref: (1, tn)    o_ref: (tm, tn)   acc_ref: (tm, tn) f32 scratch
    k = pl.program_id(2)

    @pl.when(k == 0)
    def _():
        acc_ref[...] = jnp.zeros_like(acc_ref)

    acc_ref[...] += lax.dot_general(
        x_ref[...], w_ref[...],
        dimension_numbers=(((1,), (1,)), ((), ())),   # contract K of both
        preferred_element_type=jnp.float32)

    @pl.when(k == pl.num_programs(2) - 1)
    def _():
        o_ref[...] = (acc_ref[...] + b_ref[...].astype(jnp.float32)).astype(o_ref.dtype)


# -----------------------------------------------------------------------------
# Wrapper: PyTorch nn.Linear forward  y = x @ W.T + b
# -----------------------------------------------------------------------------
@functools.partial(jax.jit, static_argnames=("tm", "tn", "tk"))
def fully_connected(x, weight, bias, *, tm=256, tn=256, tk=512):
    """x: (..., input_dim); weight: (output_dim, input_dim) torch layout; bias: (output_dim,)."""
    *lead, K = x.shape
    N = weight.shape[0]
    out_dtype = x.dtype

    x2 = x.reshape(-1, K)
    M = x2.shape[0]

    # Clamp tiles to the (lane/sublane aligned) problem size.
    tm = min(tm, _round_up(M, 8))
    tn = min(tn, _round_up(N, 128))
    tk = min(tk, _round_up(K, 128))

    # Pad every axis up to a tile multiple (zero padding along K is exact);
    # output is sliced back below.  This replaces the old "tm = M" fallback.
    Mp, Np, Kp = _round_up(M, tm), _round_up(N, tn), _round_up(K, tk)
    if (Mp, Kp) != (M, K):
        x2 = jnp.pad(x2, ((0, Mp - M), (0, Kp - K)))
    w = weight
    if (Np, Kp) != (N, K):
        w = jnp.pad(w, ((0, Np - N), (0, Kp - K)))
    b2 = bias.reshape(1, N)
    if Np != N:
        b2 = jnp.pad(b2, ((0, 0), (0, Np - N)))

    grid = (Mp // tm, Np // tn, Kp // tk)

    bytes_per = jnp.dtype(out_dtype).itemsize
    cost = pl.CostEstimate(
        flops=2 * M * K * N,
        transcendentals=0,
        bytes_accessed=(M * K + N * K + N + M * N) * bytes_per,
    )

    out = pl.pallas_call(
        linear_kernel,
        out_shape=jax.ShapeDtypeStruct((Mp, Np), out_dtype),
        grid_spec=pltpu.PrefetchScalarGridSpec(
            num_scalar_prefetch=0,
            grid=grid,
            in_specs=[
                pl.BlockSpec((tm, tk), lambda i, j, k: (i, k)),   # x row/K tile
                pl.BlockSpec((tn, tk), lambda i, j, k: (j, k)),   # weight tile (torch layout)
                pl.BlockSpec((1, tn), lambda i, j, k: (0, j)),    # bias tile
            ],
            out_specs=pl.BlockSpec((tm, tn), lambda i, j, k: (i, j)),
            scratch_shapes=[pltpu.VMEM((tm, tn), jnp.float32)],
        ),
        compiler_params=pltpu.CompilerParams(
            dimension_semantics=("parallel", "parallel", "arbitrary"),
            vmem_limit_bytes=32 * 1024 * 1024,
        ),
        cost_estimate=cost,
    )(x2, w, b2)

    return out[:M, :N].reshape(*lead, N)


# -----------------------------------------------------------------------------
# Example run with deterministic synthetic inputs (bf16 model dtype)
# -----------------------------------------------------------------------------
if __name__ == "__main__":
    key = jax.random.PRNGKey(0)
    k_x, k_w, k_b = jax.random.split(key, 3)

    # Small shapes consistent with nn.Linear: batch=2, seq=8, in=128, out=128.
    B, S, IN_DIM, OUT_DIM = 2, 8, 128, 128
    x = jax.random.normal(k_x, (B, S, IN_DIM), jnp.float32).astype(jnp.bfloat16)
    weight = (0.05 * jax.random.normal(k_w, (OUT_DIM, IN_DIM), jnp.float32)).astype(jnp.bfloat16)
    bias = (0.05 * jax.random.normal(k_b, (OUT_DIM,), jnp.float32)).astype(jnp.bfloat16)

    y = fully_connected(x, weight, bias)
    y = jax.block_until_ready(y)
    assert y.shape == (B, S, OUT_DIM), y.shape
    assert y.dtype == jnp.bfloat16, y.dtype

    # Parity check against the plain-JAX reference of nn.Linear (f32 math on the
    # same bf16-rounded parameters; bf16 output tolerance).
    ref = (x.astype(jnp.float32).reshape(-1, IN_DIM)
           @ weight.astype(jnp.float32).T
           + bias.astype(jnp.float32))
    assert jnp.allclose(y.astype(jnp.float32).reshape(-1, OUT_DIM), ref,
                        atol=2e-2, rtol=2e-2)

    print("KERNEL_OK")
</pallas_src>

<mosaic_0001>
module attributes {stable_mosaic.version = 11 : i64} {
  func.func @linear_kernel(%arg0: i32, %arg1: i32, %arg2: i32, %arg3: memref<16x128xbf16, #tpu.memory_space<vmem>>, %arg4: memref<128x128xbf16, #tpu.memory_space<vmem>>, %arg5: memref<1x128xbf16, #tpu.memory_space<vmem>>, %arg6: memref<16x128xbf16, #tpu.memory_space<vmem>>, %arg7: memref<16x128xf32, #tpu.memory_space<vmem>>) attributes {dimension_semantics = [#tpu.dimension_semantics<parallel>, #tpu.dimension_semantics<parallel>, #tpu.dimension_semantics<arbitrary>], iteration_bounds = array<i64: 1, 1, 1>, scalar_prefetch = 0 : i64, scratch_operands = 1 : i64, tpu.core_type = #tpu.core_type<tc>, window_params = [{transform_indices = @transform_0, window_bounds = array<i64: 16, 128>}, {transform_indices = @transform_1, window_bounds = array<i64: 128, 128>}, {transform_indices = @transform_2, window_bounds = array<i64: 1, 128>}, {transform_indices = @transform_3, window_bounds = array<i64: 16, 128>}]} {
    %c0_i32 = arith.constant 0 : i32
    %0 = arith.cmpi eq, %arg2, %c0_i32 : i32
    %1 = arith.extui %0 : i1 to i32
    %c0_i32_0 = arith.constant 0 : i32
    %2 = arith.cmpi ne, %1, %c0_i32_0 : i32
    scf.if %2 {
      %cst_10 = arith.constant 0.000000e+00 : f32
      %12 = vector.broadcast %cst_10 : f32 to vector<16x128xf32>
      %c0_11 = arith.constant 0 : index
      %c0_12 = arith.constant 0 : index
      %13 = vector.load %arg7[%c0_11, %c0_12] : memref<16x128xf32, #tpu.memory_space<vmem>>, vector<16x128xf32>
      tpu.vector_store %arg7[%c0_11, %c0_12], %12 {strides = array<i32>} : memref<16x128xf32, #tpu.memory_space<vmem>>, vector<16x128xf32>,
    } else {
    }
    %c0 = arith.constant 0 : index
    %c0_1 = arith.constant 0 : index
    %3 = vector.load %arg7[%c0, %c0_1] : memref<16x128xf32, #tpu.memory_space<vmem>>, vector<16x128xf32>
    %c0_2 = arith.constant 0 : index
    %c0_3 = arith.constant 0 : index
    %4 = vector.load %arg3[%c0_2, %c0_3] : memref<16x128xbf16, #tpu.memory_space<vmem>>, vector<16x128xbf16>
    %c0_4 = arith.constant 0 : index
    %c0_5 = arith.constant 0 : index
    %5 = vector.load %arg4[%c0_4, %c0_5] : memref<128x128xbf16, #tpu.memory_space<vmem>>, vector<128x128xbf16>
    %cst = arith.constant dense<0.000000e+00> : vector<16x128xf32>
    %6 = tpu.matmul %4, %5, %cst {dimension_numbers = #tpu.dot_dimension_numbers<[1], [1], [0], [0], [0, 0, 1, 0], [], []>} : vector<16x128xbf16>, vector<128x128xbf16>, vector<16x128xf32> -> vector<16x128xf32>
    %7 = arith.addf %3, %6 : vector<16x128xf32>
    %c0_6 = arith.constant 0 : index
    %c0_7 = arith.constant 0 : index
    %8 = vector.load %arg7[%c0_6, %c0_7] : memref<16x128xf32, #tpu.memory_space<vmem>>, vector<16x128xf32>
    tpu.vector_store %arg7[%c0_6, %c0_7], %7 {strides = array<i32>} : memref<16x128xf32, #tpu.memory_space<vmem>>, vector<16x128xf32>,
    %c0_i32_8 = arith.constant 0 : i32
    %9 = arith.cmpi eq, %arg2, %c0_i32_8 : i32
    %10 = arith.extui %9 : i1 to i32
    %c0_i32_9 = arith.constant 0 : i32
    %11 = arith.cmpi ne, %10, %c0_i32_9 : i32
    scf.if %11 {
      %c0_10 = arith.constant 0 : index
      %c0_11 = arith.constant 0 : index
      %12 = vector.load %arg7[%c0_10, %c0_11] : memref<16x128xf32, #tpu.memory_space<vmem>>, vector<16x128xf32>
      %c0_12 = arith.constant 0 : index
      %c0_13 = arith.constant 0 : index
      %13 = vector.load %arg5[%c0_12, %c0_13] : memref<1x128xbf16, #tpu.memory_space<vmem>>, vector<1x128xbf16>
      %14 = arith.extf %13 : vector<1x128xbf16> to vector<1x128xf32>
      %15 = vector.broadcast %14 : vector<1x128xf32> to vector<16x128xf32>
      %16 = arith.addf %12, %15 : vector<16x128xf32>
      %17 = arith.truncf %16 : vector<16x128xf32> to vector<16x128xbf16>
      %c0_14 = arith.constant 0 : index
      %c0_15 = arith.constant 0 : index
      %18 = vector.load %arg6[%c0_14, %c0_15] : memref<16x128xbf16, #tpu.memory_space<vmem>>, vector<16x128xbf16>
      tpu.vector_store %arg6[%c0_14, %c0_15], %17 {strides = array<i32>} : memref<16x128xbf16, #tpu.memory_space<vmem>>, vector<16x128xbf16>,
    } else {
    }
    return
  }
  func.func @transform_0(%arg0: i32, %arg1: i32, %arg2: i32) -> (i32, i32) {
    %c0_i32 = arith.constant 0 : i32
    return %arg0, %arg2 : i32, i32
  }
  func.func @transform_1(%arg0: i32, %arg1: i32, %arg2: i32) -> (i32, i32) {
    %c0_i32 = arith.constant 0 : i32
    return %arg1, %arg2 : i32, i32
  }
  func.func @transform_2(%arg0: i32, %arg1: i32, %arg2: i32) -> (i32, i32) {
    %c0_i32 = arith.constant 0 : i32
    %c0_i32_0 = arith.constant 0 : i32
    return %c0_i32, %arg1 : i32, i32
  }
  func.func @transform_3(%arg0: i32, %arg1: i32, %arg2: i32) -> (i32, i32) {
    %c0_i32 = arith.constant 0 : i32
    return %arg0, %arg1 : i32, i32
  }
}

</mosaic_0001>

<llo_original>
// kernel: fully_connected.1
$region0: #{fully_connected.1}
  #allocation0 [shape = 'u32[]', space=smem, size = 0x4, offset = 0x4, fixed_abs, tag = 'smem constant byte address 0x4 - core index']
  #allocation1 [shape = 'u32[72,128]{1,0:T(1,128)}', space=vmem, size = 0x9000, scoped, tag = 'internal scratch']
  #allocation2 [shape = 'f32[16,128]{1,0:T(8,128)}', space=vmem, size = 0x2000, scoped, tag = 'scratch operand']
  %s0 = inlined_call_operand.hbm [shape: bf16[16,128], index: 0, kind: input, shape index: {}]
  %s1 = inlined_call_operand.hbm [shape: bf16[128,128], index: 1, kind: input, shape index: {}]
  %s2 = inlined_call_operand.vmem [shape: bf16[1,128], index: 2, kind: input, shape index: {}]
  %s3 = inlined_call_operand.hbm [shape: bf16[16,128], index: 3, kind: output, shape index: {}]
  %s4 = sld [smem:[#allocation0]]
  $region38: #{fully_connected.1} parent=0
    _
  %s6 = ssub.s32 1, %s4
  %s7 = scalar_select 0, %s6, %s4
  $region1: #{fully_connected.1} parent=0
    #allocation3 [shape = 'u8[4096]{0}', space=vmem, size = 0x1000, scoped, tag = 'input window, operand 0, single buffered']
    #allocation4 [shape = 's32[1]{0}', space=sflag, size = 0x4, scoped, tag = 'scoped memory for fully_connected.1']
    #allocation5 [shape = 's32[1]{0}', space=sflag, size = 0x4, scoped, tag = 'scoped memory for fully_connected.1']
    #allocation6 [shape = 'u8[32768]{0}', space=vmem, size = 0x8000, scoped, tag = 'input window, operand 1, single buffered']
    #allocation7 [shape = 's32[1]{0}', space=sflag, size = 0x4, scoped, tag = 'scoped memory for fully_connected.1']
    #allocation8 [shape = 'u8[4096]{0}', space=vmem, size = 0x1000, scoped, tag = 'output window, operand 0, single buffered']
    %8 = vsyncpa [#allocation4], 0
    %9 = vsyncpa [#allocation7], 0
    %10 = vsyncpa [#allocation5], 0
    // Predicated region
    $region2: #{fully_connected.1} parent=1 // pred_check
      _
    $region3: #{fully_connected.1} parent=1 // pred_check_branch
      %12 = sbr.rel (0) target = $region5
    $region4: #{fully_connected.1} parent=1 // pred_region
      %14 = vsyncadd [#allocation4], 0
      %s15 = sshll.u32 %s0, 4
      %s16 = int_to_ptr.hbm [resolvable:$true] %s15
      %s17 = sshll.u32 [#allocation3], 4
      %s18 = int_to_ptr.vmem [resolvable:$true] %s17
      %23 = dma.hbm_to_vmem [thread:$0]  %s16, 128, %s18, [#allocation4], 64, 64, 4
    $region5: #{fully_connected.1} parent=1 // pred_fallthru
      _
    // Predicated region
    $region6: #{fully_connected.1} parent=1 // pred_check
      _
    $region7: #{fully_connected.1} parent=1 // pred_check_branch
      %25 = sbr.rel (0) target = $region9
    $region8: #{fully_connected.1} parent=1 // pred_region
      %27 = vsyncadd [#allocation7], 0
      %s28 = sshll.u32 %s1, 4
      %s29 = int_to_ptr.hbm [resolvable:$true] %s28
      %s30 = sshll.u32 [#allocation6], 4
      %s31 = int_to_ptr.vmem [resolvable:$true] %s30
      %36 = dma.hbm_to_vmem [thread:$0]  %s29, 1024, %s31, [#allocation7], 64, 64, 4
    $region9: #{fully_connected.1} parent=1 // pred_fallthru
      _
    // Predicated region
    $region10: #{fully_connected.1} parent=1 // pred_check
      _
    $region11: #{fully_connected.1} parent=1 // pred_check_branch
      %38 = sbr.rel (0) target = $region13
    $region12: #{fully_connected.1} parent=1 // pred_region
      _
    $region13: #{fully_connected.1} parent=1 // pred_fallthru
      _
    // Predicated region
    $region14: #{fully_connected.1} parent=1 // pred_check
      _
    $region15: #{fully_connected.1} parent=1 // pred_check_branch
      %40 = sbr.rel (0) target = $region17
    $region16: #{fully_connected.1} parent=1 // pred_region
      %42 = dma.done [#allocation4], 128
    $region17: #{fully_connected.1} parent=1 // pred_fallthru
      _
    // Predicated region
    $region18: #{fully_connected.1} parent=1 // pred_check
      _
    $region19: #{fully_connected.1} parent=1 // pred_check_branch
      %44 = sbr.rel (0) target = $region21
    $region20: #{fully_connected.1} parent=1 // pred_region
      %46 = dma.done [#allocation7], 1024
    $region21: #{fully_connected.1} parent=1 // pred_fallthru
      _
    %p47 = scmp.eq.s32.totalorder 0, 0
    // Predicated region
    $region22: #{fully_connected.1} parent=1 // pred_check
      %p48 = pneg %p47
    $region23: #{fully_connected.1} parent=1 // pred_check_branch
      %50 = sbr.rel (%p48) target = $region25
    $region24: #{fully_connected.1} parent=1 // pred_region
      %51 = vst [vmem:[#allocation2] sm:$0xff] 0.0
      %52 = vst [vmem:[#allocation2 + $0x8] sm:$0xff] 0.0
    $region25: #{fully_connected.1} parent=1 // pred_fallthru
      _
    %v53 = vld [vmem:[#allocation2] sm:$0xff]
    %v54 = vld [vmem:[#allocation2 + $0x8] sm:$0xff]
    %v55 = vld [vmem:[#allocation3] sm:$0xf]
    %v56 = vld [vmem:[#allocation3 + $0x4] sm:$0xf]
    %v57 = vld [vmem:[#allocation6] sm:$0xf]
    %v58 = vld [vmem:[#allocation6 + $0x4] sm:$0xf]
    %v59 = vld [vmem:[#allocation6 + $0x8] sm:$0xf]
    %v60 = vld [vmem:[#allocation6 + $0xc] sm:$0xf]
    %v61 = vld [vmem:[#allocation6 + $0x10] sm:$0xf]
    %v62 = vld [vmem:[#allocation6 + $0x14] sm:$0xf]
    %v63 = vld [vmem:[#allocation6 + $0x18] sm:$0xf]
    %v64 = vld [vmem:[#allocation6 + $0x1c] sm:$0xf]
    %v65 = vld [vmem:[#allocation6 + $0x20] sm:$0xf]
    %v66 = vld [vmem:[#allocation6 + $0x24] sm:$0xf]
    %v67 = vld [vmem:[#allocation6 + $0x28] sm:$0xf]
    %v68 = vld [vmem:[#allocation6 + $0x2c] sm:$0xf]
    %v69 = vld [vmem:[#allocation6 + $0x30] sm:$0xf]
    %v70 = vld [vmem:[#allocation6 + $0x34] sm:$0xf]
    %v71 = vld [vmem:[#allocation6 + $0x38] sm:$0xf]
    %v72 = vld [vmem:[#allocation6 + $0x3c] sm:$0xf]
    %v75 = vunpack.c.l.b16 %v55
    %v76 = vunpack.c.l.b16 %v56
    %v77 = vpack.c.b16 %v76, %v75
    %v95 = vunpack.c.l.b16 %v57
    %v96 = vunpack.c.l.b16 %v58
    %v97 = vunpack.c.l.b16 %v59
    %v98 = vunpack.c.l.b16 %v60
    %v99 = vunpack.c.l.b16 %v61
    %v100 = vunpack.c.l.b16 %v62
    %v101 = vunpack.c.l.b16 %v63
    %v102 = vunpack.c.l.b16 %v64
    %v103 = vunpack.c.l.b16 %v65
    %v104 = vunpack.c.l.b16 %v66
    %v105 = vunpack.c.l.b16 %v67
    %v106 = vunpack.c.l.b16 %v68
    %v107 = vunpack.c.l.b16 %v69
    %v108 = vunpack.c.l.b16 %v70
    %v109 = vunpack.c.l.b16 %v71
    %v110 = vunpack.c.l.b16 %v72
    %v111 = vpack.c.b16 %v96, %v95
    %v112 = vpack.c.b16 %v98, %v97
    %v113 = vpack.c.b16 %v100, %v99
    %v114 = vpack.c.b16 %v102, %v101
    %v115 = vpack.c.b16 %v104, %v103
    %v116 = vpack.c.b16 %v106, %v105
    %v117 = vpack.c.b16 %v108, %v107
    %v118 = vpack.c.b16 %v110, %v109
    %127 = vmatpush.bf16.xpose.msra.mxu0 %v118
    %128 = vmatpush.bf16.xpose.msra.mxu0 %v117
    %129 = vmatpush.bf16.xpose.msra.mxu0 %v116
    %130 = vmatpush.bf16.xpose.msra.mxu0 %v115
    %131 = vmatpush.bf16.xpose.msra.mxu0 %v114
    %132 = vmatpush.bf16.xpose.msra.mxu0 %v113
    %133 = vmatpush.bf16.xpose.msra.mxu0 %v112
    %134 = vmatpush.bf16.xpose.msra.mxu0 %v111
    %135 = vmatmul.bf16.gmra.mxu0 %v77
    %v136 = vpop.f32.mrf.mxu0
    %v137 = vadd.f32 0.0, %v136
    %v138 = vpop.f32.mrf.mxu0
    %v139 = vadd.f32 0.0, %v138
    %140 = vdwg.mxu0
    %v141 = vadd.f32 %v53, %v137
    %v142 = vadd.f32 %v54, %v139
    %143 = vst [vmem:[#allocation2] sm:$0xff] %v141
    %144 = vst [vmem:[#allocation2 + $0x8] sm:$0xff] %v142
    // Predicated region
    $region26: #{fully_connected.1} parent=1 // pred_check
      %p145 = pneg %p47
    $region27: #{fully_connected.1} parent=1 // pred_check_branch
      %147 = sbr.rel (%p145) target = $region29
    $region28: #{fully_connected.1} parent=1 // pred_region
      %v148 = vld [vmem:[#allocation2] sm:$0xff]
      %v149 = vld [vmem:[#allocation2 + $0x8] sm:$0xff]
      %v150 = vld [vmem:[%s2] sm:$0x1]
      %v151 = vunpack.c.l.bf16 %v150
      %v152 = vperm.slane %v151, 0
      %v153 = vadd.f32 %v148, %v152
      %v154 = vadd.f32 %v149, %v152
      %v155 = vpack.c.bf16 %v153, %v153
      %v156 = vpack.c.bf16 %v154, %v154
      %157 = vst [vmem:[#allocation8] sm:$0xf] %v155
      %158 = vst [vmem:[#allocation8 + $0x4] sm:$0xf] %v156
    $region29: #{fully_connected.1} parent=1 // pred_fallthru
      _
    // Predicated region
    $region30: #{fully_connected.1} parent=1 // pred_check
      _
    $region31: #{fully_connected.1} parent=1 // pred_check_branch
      %160 = sbr.rel (0) target = $region33
    $region32: #{fully_connected.1} parent=1 // pred_region
      %162 = vsyncadd [#allocation5], 0
      %s163 = sshll.u32 [#allocation8], 4
      %s164 = int_to_ptr.vmem [resolvable:$true] %s163
      %s165 = sshll.u32 %s3, 4
      %s166 = int_to_ptr.hbm [resolvable:$true] %s165
      %171 = dma.vmem_to_hbm [thread:$0]  %s164, 128, %s166, [#allocation5], 64, 64, 4
    $region33: #{fully_connected.1} parent=1 // pred_fallthru
      _
    // Predicated region
    $region34: #{fully_connected.1} parent=1 // pred_check
      _
    $region35: #{fully_connected.1} parent=1 // pred_check_branch
      %173 = sbr.rel (0) target = $region37
    $region36: #{fully_connected.1} parent=1 // pred_region
      %175 = dma.done [#allocation5], 128
    $region37: #{fully_connected.1} parent=1 // pred_fallthru
      _
    %176 = vsyncpa [#allocation4], 1
    %177 = vsyncpa [#allocation7], 1
    %178 = vsyncpa [#allocation5], 1

</llo_original>
